<compile_context>
chip_gen: v7x
topology: tpu7x:2x2x1
jax: 0.10.0
libtpu: 0.0.40
codegen_flags: <defaults>
</compile_context>

<pallas_src>
import functools

import jax
import jax.numpy as jnp
from jax import lax
from jax.experimental import pallas as pl
from jax.experimental.pallas import tpu as pltpu

EPS = 1e-5


def _bn_stats_kernel(x_ref, sum_ref, sumsq_ref):
    """Per-channel partial sum / sum-of-squares for one batch-block.

    x_ref:     (TB, Cin, H*W)  TB images, H*W on lanes
    sum_ref:   (1, Cin, 1)     partial sum for this grid step
    sumsq_ref: (1, Cin, 1)     partial sum of squares for this grid step
    """
    TB = x_ref.shape[0]
    s = None
    ss = None
    for t in range(TB):
        xt = x_ref[t].astype(jnp.float32)                   # (Cin, HW)
        st = jnp.sum(xt, axis=1, keepdims=True)             # lane (XLU) reduce -> (Cin, 1)
        sst = jnp.sum(xt * xt, axis=1, keepdims=True)
        s = st if s is None else s + st
        ss = sst if ss is None else ss + sst
    sum_ref[0] = s
    sumsq_ref[0] = ss


def _bn_conv_relu_kernel(x_ref, a_ref, b_ref, w_ref, o_ref, *, H, W, mxu_dtype):
    """Fused (a*x + b) -> 3x3 'same' conv as ONE stacked matmul -> ReLU.

    x_ref: (TB, Cin, H*W)   TB images, H*W on lanes
    a_ref: (Cin, 1)         BN scale  = gamma * rsqrt(var + eps)
    b_ref: (Cin, 1)         BN shift  = beta - a * mean
    w_ref: (Cout, 9*Cin)    conv weights, K ordered (tap=kh*3+kw major, cin minor)
    o_ref: (TB, Cout, H*W)
    """
    TB, Cin, HW = x_ref.shape

    a = a_ref[...]                                          # (Cin, 1) f32
    b = b_ref[...]
    w = w_ref[...].astype(mxu_dtype)                        # (Cout, 9*Cin)

    # Boundary masks for 'same' zero padding; padding applies AFTER normalization, so any
    # out-of-bounds tap must contribute exactly zero.  Computed once, reused for all images.
    hw_idx = lax.broadcasted_iota(jnp.int32, (1, HW), 1)
    h_idx = hw_idx // W
    w_idx = hw_idx % W
    offsets = []
    valids = []
    for kh in range(3):
        for kw in range(3):
            dh, dw = kh - 1, kw - 1
            offsets.append(dh * W + dw)
            valids.append((h_idx + dh >= 0) & (h_idx + dh < H) &
                          (w_idx + dw >= 0) & (w_idx + dw < W))     # (1, HW)

    for t in range(TB):
        # Normalize: a*x + b (safe for gamma == 0; one extra VPU mul per element).
        xn = x_ref[t].astype(jnp.float32) * a + b           # (Cin, HW)

        # Build the stacked K = 9*Cin operand: tap[c, hw] = xn[c, hw + off], masked at borders.
        taps = []
        for off, valid in zip(offsets, valids):
            tap = xn if off == 0 else pltpu.roll(xn, (-off) % HW, 1)
            taps.append(jnp.where(valid, tap, 0.0))
        stacked = jnp.concatenate(taps, axis=0).astype(mxu_dtype)   # (9*Cin, HW)

        # One MXU matmul: (Cout, 9*Cin) @ (9*Cin, HW), f32 accumulation.
        acc = jnp.dot(w, stacked, preferred_element_type=jnp.float32)
        o_ref[t] = jnp.maximum(acc, 0.0).astype(o_ref.dtype)


def norm_conv2d_relu(x_nchw, gamma, beta, w_oihw, *, mxu_dtype=jnp.float32):
    """Matches the PyTorch module: x NCHW, weight OIHW (Cout, Cin, 3, 3), training-mode BN.

    mxu_dtype: set to jnp.bfloat16 on v6e/v7x for full-rate MXU if the accuracy budget allows.
    """
    N, Cin, H, W = x_nchw.shape
    Cout = w_oihw.shape[0]
    HW = H * W

    # Free (contiguous) reshape, native dtype -- no HBM transpose and no f32 up-cast in HBM.
    x = x_nchw.reshape(N, Cin, HW)

    # Batch multiple images per grid step to amortize per-step overhead at small H*W.
    TB = next(d for d in (8, 4, 2, 1) if N % d == 0)
    G = N // TB

    # ---- pass 1: BN batch statistics as parallel per-block partial sums ----
    partial_s, partial_ss = pl.pallas_call(
        _bn_stats_kernel,
        grid=(G,),
        in_specs=[pl.BlockSpec((TB, Cin, HW), lambda g: (g, 0, 0))],
        out_specs=[pl.BlockSpec((1, Cin, 1), lambda g: (g, 0, 0)),
                   pl.BlockSpec((1, Cin, 1), lambda g: (g, 0, 0))],
        out_shape=[jax.ShapeDtypeStruct((G, Cin, 1), jnp.float32),
                   jax.ShapeDtypeStruct((G, Cin, 1), jnp.float32)],
        compiler_params=pltpu.CompilerParams(
            dimension_semantics=("parallel",),
            vmem_limit_bytes=48 * 1024 * 1024),
    )(x)

    cnt = jnp.float32(N * H * W)
    s = jnp.sum(partial_s[:, :, 0], axis=0)                 # (Cin,)
    ss = jnp.sum(partial_ss[:, :, 0], axis=0)               # (Cin,)
    mean = s / cnt
    var = ss / cnt - mean * mean                            # biased variance (training-mode BN)
    a = gamma.astype(jnp.float32) * lax.rsqrt(var + EPS)    # (Cin,)
    b = beta.astype(jnp.float32) - a * mean                 # (Cin,)
    a2 = a.reshape(Cin, 1)
    b2 = b.reshape(Cin, 1)

    # (Cout, Cin, 3, 3) -> (Cout, 9*Cin), K ordered tap-major (kh*3+kw), cin-minor (tiny tensor).
    wmat = jnp.transpose(w_oihw.astype(jnp.float32), (0, 2, 3, 1)).reshape(Cout, 9 * Cin)

    # ---- pass 2: fused BN + 3x3 conv (single stacked matmul) + ReLU ----
    kernel = functools.partial(_bn_conv_relu_kernel, H=H, W=W, mxu_dtype=mxu_dtype)
    out = pl.pallas_call(
        kernel,
        grid=(G,),
        in_specs=[pl.BlockSpec((TB, Cin, HW), lambda g: (g, 0, 0)),
                  pl.BlockSpec((Cin, 1), lambda g: (0, 0)),
                  pl.BlockSpec((Cin, 1), lambda g: (0, 0)),
                  pl.BlockSpec((Cout, 9 * Cin), lambda g: (0, 0))],
        out_specs=pl.BlockSpec((TB, Cout, HW), lambda g: (g, 0, 0)),
        out_shape=jax.ShapeDtypeStruct((N, Cout, HW), x_nchw.dtype),
        compiler_params=pltpu.CompilerParams(
            dimension_semantics=("parallel",),
            vmem_limit_bytes=48 * 1024 * 1024),
    )(x, a2, b2, wmat)

    return out.reshape(N, Cout, H, W)   # free reshape back to NCHW


def _reference(x_nchw, gamma, beta, w_oihw):
    """Pure-JAX reference (same semantics as the PyTorch module in training mode)."""
    mean = jnp.mean(x_nchw, axis=(0, 2, 3), keepdims=True)
    var = jnp.var(x_nchw, axis=(0, 2, 3), keepdims=True)  # biased variance
    xn = (x_nchw - mean) / jnp.sqrt(var + EPS)
    xn = xn * gamma.reshape(1, -1, 1, 1) + beta.reshape(1, -1, 1, 1)
    y = lax.conv_general_dilated(
        xn, w_oihw, window_strides=(1, 1), padding="SAME",
        dimension_numbers=("NCHW", "OIHW", "NCHW"))
    return jnp.maximum(y, 0.0)


if __name__ == "__main__":
    key = jax.random.PRNGKey(0)
    k_x, k_w, k_g, k_b = jax.random.split(key, 4)

    N, C_IN, C_OUT, H, W = 2, 4, 8, 16, 16

    x = jax.random.normal(k_x, (N, C_IN, H, W), dtype=jnp.float32)            # NCHW
    w = 0.1 * jax.random.normal(k_w, (C_OUT, C_IN, 3, 3), dtype=jnp.float32)  # OIHW
    gamma = 1.0 + 0.1 * jax.random.normal(k_g, (C_IN,), dtype=jnp.float32)
    beta = 0.1 * jax.random.normal(k_b, (C_IN,), dtype=jnp.float32)

    out = jax.block_until_ready(norm_conv2d_relu(x, gamma, beta, w))
    ref = jax.block_until_ready(_reference(x, gamma, beta, w))

    assert out.shape == (N, C_OUT, H, W), out.shape
    max_err = float(jnp.max(jnp.abs(out - ref)))
    assert jnp.allclose(out, ref, atol=1e-4, rtol=1e-4), max_err

    print("KERNEL_OK")
</pallas_src>

<mosaic_0001>
module attributes {stable_mosaic.version = 11 : i64} {
  func.func @_bn_stats_kernel(%arg0: i32, %arg1: memref<2x4x256xf32, #tpu.memory_space<vmem>>, %arg2: memref<1x4x1xf32, #tpu.memory_space<vmem>>, %arg3: memref<1x4x1xf32, #tpu.memory_space<vmem>>) attributes {dimension_semantics = [#tpu.dimension_semantics<parallel>], iteration_bounds = array<i64: 1>, scalar_prefetch = 0 : i64, scratch_operands = 0 : i64, tpu.core_type = #tpu.core_type<tc>, window_params = [{transform_indices = @transform_0, window_bounds = array<i64: 2, 4, 256>}, {transform_indices = @transform_1, window_bounds = array<i64: 1, 4, 1>}, {transform_indices = @transform_2, window_bounds = array<i64: 1, 4, 1>}]} {
    %c0 = arith.constant 0 : index
    %c0_0 = arith.constant 0 : index
    %c0_1 = arith.constant 0 : index
    %0 = vector.load %arg1[%c0, %c0_0, %c0_1] : memref<2x4x256xf32, #tpu.memory_space<vmem>>, vector<1x4x256xf32>
    %1 = vector.shape_cast %0 : vector<1x4x256xf32> to vector<4x256xf32>
    %cst = arith.constant dense<0.000000e+00> : vector<4xf32>
    %2 = vector.multi_reduction <add>, %1, %cst [1] : vector<4x256xf32> to vector<4xf32>
    %3 = vector.shape_cast %2 : vector<4xf32> to vector<4x1xf32>
    %4 = arith.mulf %1, %1 : vector<4x256xf32>
    %cst_2 = arith.constant dense<0.000000e+00> : vector<4xf32>
    %5 = vector.multi_reduction <add>, %4, %cst_2 [1] : vector<4x256xf32> to vector<4xf32>
    %6 = vector.shape_cast %5 : vector<4xf32> to vector<4x1xf32>
    %c1 = arith.constant 1 : index
    %c0_3 = arith.constant 0 : index
    %c0_4 = arith.constant 0 : index
    %7 = vector.load %arg1[%c1, %c0_3, %c0_4] : memref<2x4x256xf32, #tpu.memory_space<vmem>>, vector<1x4x256xf32>
    %8 = vector.shape_cast %7 : vector<1x4x256xf32> to vector<4x256xf32>
    %cst_5 = arith.constant dense<0.000000e+00> : vector<4xf32>
    %9 = vector.multi_reduction <add>, %8, %cst_5 [1] : vector<4x256xf32> to vector<4xf32>
    %10 = vector.shape_cast %9 : vector<4xf32> to vector<4x1xf32>
    %11 = arith.mulf %8, %8 : vector<4x256xf32>
    %cst_6 = arith.constant dense<0.000000e+00> : vector<4xf32>
    %12 = vector.multi_reduction <add>, %11, %cst_6 [1] : vector<4x256xf32> to vector<4xf32>
    %13 = vector.shape_cast %12 : vector<4xf32> to vector<4x1xf32>
    %14 = arith.addf %3, %10 : vector<4x1xf32>
    %15 = arith.addf %6, %13 : vector<4x1xf32>
    %c0_7 = arith.constant 0 : index
    %c0_8 = arith.constant 0 : index
    %c0_9 = arith.constant 0 : index
    %16 = vector.load %arg2[%c0_7, %c0_8, %c0_9] : memref<1x4x1xf32, #tpu.memory_space<vmem>>, vector<1x4x1xf32>
    %17 = vector.shape_cast %16 : vector<1x4x1xf32> to vector<4x1xf32>
    %18 = vector.shape_cast %14 : vector<4x1xf32> to vector<1x4x1xf32>
    tpu.vector_store %arg2[%c0_7, %c0_8, %c0_9], %18 {strides = array<i32>} : memref<1x4x1xf32, #tpu.memory_space<vmem>>, vector<1x4x1xf32>,
    %c0_10 = arith.constant 0 : index
    %c0_11 = arith.constant 0 : index
    %c0_12 = arith.constant 0 : index
    %19 = vector.load %arg3[%c0_10, %c0_11, %c0_12] : memref<1x4x1xf32, #tpu.memory_space<vmem>>, vector<1x4x1xf32>
    %20 = vector.shape_cast %19 : vector<1x4x1xf32> to vector<4x1xf32>
    %21 = vector.shape_cast %15 : vector<4x1xf32> to vector<1x4x1xf32>
    tpu.vector_store %arg3[%c0_10, %c0_11, %c0_12], %21 {strides = array<i32>} : memref<1x4x1xf32, #tpu.memory_space<vmem>>, vector<1x4x1xf32>,
    return
  }
  func.func @transform_0(%arg0: i32) -> (i32, i32, i32) {
    %c0_i32 = arith.constant 0 : i32
    %c0_i32_0 = arith.constant 0 : i32
    %c0_i32_1 = arith.constant 0 : i32
    return %arg0, %c0_i32, %c0_i32_0 : i32, i32, i32
  }
  func.func @transform_1(%arg0: i32) -> (i32, i32, i32) {
    %c0_i32 = arith.constant 0 : i32
    %c0_i32_0 = arith.constant 0 : i32
    %c0_i32_1 = arith.constant 0 : i32
    return %arg0, %c0_i32, %c0_i32_0 : i32, i32, i32
  }
  func.func @transform_2(%arg0: i32) -> (i32, i32, i32) {
    %c0_i32 = arith.constant 0 : i32
    %c0_i32_0 = arith.constant 0 : i32
    %c0_i32_1 = arith.constant 0 : i32
    return %arg0, %c0_i32, %c0_i32_0 : i32, i32, i32
  }
}

</mosaic_0001>

<llo_original>
// kernel: tpu_custom_call.1
$region0: #{tpu_custom_call.1}
  #allocation0 [shape = 'u32[]', space=smem, size = 0x4, offset = 0x4, fixed_abs, tag = 'smem constant byte address 0x4 - core index']
  #allocation1 [shape = 'u32[144,128]{1,0:T(1,128)}', space=vmem, size = 0x12000, scoped, tag = 'internal scratch']
  %s0 = inlined_call_operand.hbm [shape: f32[2,4,256], index: 0, kind: input, shape index: {}]
  %s1 = inlined_call_operand.vmem [shape: f32[1,4,1], index: 1, kind: output, shape index: {0}]
  %s2 = inlined_call_operand.vmem [shape: f32[1,4,1], index: 2, kind: output, shape index: {1}]
  %3 = xla_tuple %s1, %s2
  %s4 = sld [smem:[#allocation0]]
  $region26: #{tpu_custom_call.1} parent=0
    _
  %s6 = ssub.s32 1, %s4
  %s7 = scalar_select 0, %s6, %s4
  $region1: #{tpu_custom_call.1} parent=0
    #allocation2 [shape = 'u8[8192]{0}', space=vmem, size = 0x2000, scoped, tag = 'input window, operand 0, single buffered']
    #allocation3 [shape = 's32[1]{0}', space=sflag, size = 0x4, scoped, tag = 'scoped memory for tpu_custom_call.1']
    %8 = vsyncpa [#allocation3], 0
    // Predicated region
    $region2: #{tpu_custom_call.1} parent=1 // pred_check
      _
    $region3: #{tpu_custom_call.1} parent=1 // pred_check_branch
      %10 = sbr.rel (0) target = $region5
    $region4: #{tpu_custom_call.1} parent=1 // pred_region
      %s12 = ssub.s32 256, 256
      %13 = vsyncadd [#allocation3], %s12
      %s14 = sshll.u32 [#allocation2], 4
      %s15 = int_to_ptr.vmem [resolvable:$true] %s14
      %20 = dma.hbm_to_vmem [thread:$0]  %s0, 256, %s15, [#allocation3], 128, 128, 8
    $region5: #{tpu_custom_call.1} parent=1 // pred_fallthru
      _
    // Predicated region
    $region6: #{tpu_custom_call.1} parent=1 // pred_check
      _
    $region7: #{tpu_custom_call.1} parent=1 // pred_check_branch
      %22 = sbr.rel (0) target = $region9
    $region8: #{tpu_custom_call.1} parent=1 // pred_region
      %23 = dma.done [#allocation3], 256
    $region9: #{tpu_custom_call.1} parent=1 // pred_fallthru
      _
    %v24 = vld [vmem:[#allocation2] sm:$0xff]
    %v26 = vcombine.high %v24, %v24
    %vm28 = vcmask 1043456
    %v29 = vsel %vm28, %v24, 0.0
    %v30 = vsel %vm28, %v26, 0.0
    %v31 = vadd.f32 %v29, %v30
    %32 = vadd.xlane.f32.xlu0 %v31
    %v33 = vpop.xlane.xlu0 %32
    %v34 = vmul.f32 %v24, %v24
    %v36 = vcombine.high %v34, %v34
    %v38 = vsel %vm28, %v34, 0.0
    %v39 = vsel %vm28, %v36, 0.0
    %v40 = vadd.f32 %v38, %v39
    %41 = vadd.xlane.f32.xlu0 %v40
    %v42 = vpop.xlane.xlu0 %41
    %s43 = scalar_lea.vmem [#allocation2], 8
    %v44 = vld [vmem:[%s43] sm:$0xff]
    %v46 = vcombine.high %v44, %v44
    %v48 = vsel %vm28, %v44, 0.0
    %v49 = vsel %vm28, %v46, 0.0
    %v50 = vadd.f32 %v48, %v49
    %51 = vadd.xlane.f32.xlu0 %v50
    %v52 = vpop.xlane.xlu0 %51
    %v53 = vmul.f32 %v44, %v44
    %v55 = vcombine.high %v53, %v53
    %v57 = vsel %vm28, %v53, 0.0
    %v58 = vsel %vm28, %v55, 0.0
    %v59 = vadd.f32 %v57, %v58
    %60 = vadd.xlane.f32.xlu0 %v59
    %v61 = vpop.xlane.xlu0 %60
    %v62 = vadd.f32 %v33, %v52
    %v63 = vadd.f32 %v42, %v61
    %vm64 = vcmask 3072
    %65 = vst.msk [vmem:[%s1] sm:$0xf] %vm64, %v62
    %66 = vst.msk [vmem:[%s2] sm:$0xf] %vm64, %v63
    // Predicated region
    $region10: #{tpu_custom_call.1} parent=1 // pred_check
      _
    $region11: #{tpu_custom_call.1} parent=1 // pred_check_branch
      %68 = sbr.rel (0) target = $region13
    $region12: #{tpu_custom_call.1} parent=1 // pred_region
      _
    $region13: #{tpu_custom_call.1} parent=1 // pred_fallthru
      _
    // Predicated region
    $region14: #{tpu_custom_call.1} parent=1 // pred_check
      _
    $region15: #{tpu_custom_call.1} parent=1 // pred_check_branch
      %70 = sbr.rel (0) target = $region17
    $region16: #{tpu_custom_call.1} parent=1 // pred_region
      _
    $region17: #{tpu_custom_call.1} parent=1 // pred_fallthru
      _
    // Predicated region
    $region18: #{tpu_custom_call.1} parent=1 // pred_check
      _
    $region19: #{tpu_custom_call.1} parent=1 // pred_check_branch
      %72 = sbr.rel (0) target = $region21
    $region20: #{tpu_custom_call.1} parent=1 // pred_region
      _
    $region21: #{tpu_custom_call.1} parent=1 // pred_fallthru
      _
    // Predicated region
    $region22: #{tpu_custom_call.1} parent=1 // pred_check
      _
    $region23: #{tpu_custom_call.1} parent=1 // pred_check_branch
      %74 = sbr.rel (0) target = $region25
    $region24: #{tpu_custom_call.1} parent=1 // pred_region
      _
    $region25: #{tpu_custom_call.1} parent=1 // pred_fallthru
      _
    %75 = vsyncpa [#allocation3], 1

</llo_original>
